<compile_context>
chip_gen: v5e
topology: v5e:2x2
jax: 0.10.0
libtpu: 0.0.40
codegen_flags: <defaults>
</compile_context>

<pallas_src>
import functools
import math

import jax
import jax.numpy as jnp
from jax.experimental import pallas as pl
from jax.experimental.pallas import tpu as pltpu

_MiB = 1024 * 1024


# ----------------------------- pad bookkeeping ------------------------------

def _round_up(v, m):
    return int(math.ceil(v / m) * m)


def get_real_missing_pad(cur_spatial, real_size, group_size):
    """Per-spatial-dim (before, after) padding so real content fits whole groups."""
    pd = []
    for cur, real, g in zip(cur_spatial, real_size, group_size):
        target = _round_up(real, g)
        pd.append((0, max(0, target - cur)))
    return pd


def to_torch_pad(pd, emb_dim_last=True):
    """Convert per-dim (before, after) pairs (dim order) to torch F.pad format."""
    flat = []
    if emb_dim_last:
        flat.extend([0, 0])  # embedding dim: no padding
    for before, after in reversed(pd):
        flat.extend([before, after])
    return tuple(flat)


# --------------------------- generation-aware policy --------------------------

def _tpu_generation():
    try:
        kind = jax.devices()[0].device_kind.lower()
    except Exception:
        return None
    for g in ("v7", "v6", "v5"):
        if g in kind:
            return g
    return None


def _vmem_policy():
    """(tile budget bytes, vmem_limit_bytes, row-tile cap) per TPU generation."""
    gen = _tpu_generation()
    if gen == "v7":
        # 64 MiB physical VMEM per TC: double-buffered in+out must stay well under.
        return 24 * _MiB, 48 * _MiB, 2048
    if gen == "v6":
        # 128 MiB physical; use the headroom for bigger tiles / longer DMAs.
        return 26 * _MiB, 64 * _MiB, 1024
    if gen == "v5":
        # Conservative: 16 MiB scoped default, but we raise the limit explicitly.
        return 11 * _MiB, 32 * _MiB, 512
    return 12 * _MiB, 32 * _MiB, 512


def _sublane_granule(dtype):
    itemsize = jnp.dtype(dtype).itemsize
    return max(8, 32 // max(itemsize, 1))  # f32: 8, bf16: 16, int8/fp8: 32


def _pick_tile_h(h, wc_in, wc_out, dtype, budget_bytes, row_cap):
    """Largest granule-multiple row count s.t. double-buffered in+out tiles fit budget.

    Returns 0 if H is smaller than the sublane granule (caller uses the full-extent
    fallback path in that case).
    """
    g = _sublane_granule(dtype)
    if h < g:
        return 0
    itemsize = jnp.dtype(dtype).itemsize
    per_row = 2 * (wc_in + wc_out) * itemsize          # x2: double-buffered in + out
    th = (budget_bytes // max(per_row, 1)) // g * g    # budget-limited
    th = min(th, row_cap, (h // g) * g)                # never exceed real H
    return max(th, g)                                  # minimal legal tile if budget tiny


def _validate_tile_h(tile_h, h, dtype):
    """Round a user-supplied tile_h to a legal sublane-granule multiple (or 0)."""
    g = _sublane_granule(dtype)
    if h < g:
        return 0
    th = (int(tile_h) // g) * g
    return min(max(th, g), (h // g) * g)


# ------------------------------- Pallas kernels -------------------------------

def _compose_row(x_val, pad_cols, dtype):
    """Append the zero W-pad strip so the tile is stored in one full-width write."""
    if pad_cols == 0:
        return x_val
    zeros = jnp.zeros((x_val.shape[0], pad_cols), dtype)
    return jnp.concatenate([x_val, zeros], axis=-1)


def _tiled_pad_kernel(x_ref, o_ref, *, th, wc_in, wc_out, h_real):
    """One (th, wc_out) lane-dense output row-tile of one batch element.

    x_ref: (th, wc_in)  input rows (clamped block; rows past h_real are undefined)
    o_ref: (th, wc_out) padded output rows
    """
    row0 = pl.program_id(1) * th  # global row index of this tile's first row
    pad_cols = wc_out - wc_in

    # Interior tile: every row is real -> copy + appended zero strip, one wide store.
    @pl.when(row0 + th <= h_real)
    def _():
        o_ref[...] = _compose_row(x_ref[...], pad_cols, o_ref.dtype)

    # Pure-pad tile: only zeros; never consumes the (clamped, junk) input block.
    @pl.when(row0 >= h_real)
    def _():
        o_ref[...] = jnp.zeros((th, wc_out), o_ref.dtype)

    # Boundary tile: select valid rows with a (th, 1) mask (broadcast over lanes),
    # zero the tail rows.  Keep the select: rows past h_real are undefined.
    @pl.when(jnp.logical_and(row0 < h_real, row0 + th > h_real))
    def _():
        rows = jax.lax.broadcasted_iota(jnp.int32, (th, 1), 0) + row0
        kept = jnp.where(rows < h_real, x_ref[...],
                         jnp.zeros((th, wc_in), o_ref.dtype))
        o_ref[...] = _compose_row(kept, pad_cols, o_ref.dtype)


def _full_pad_kernel(x_ref, o_ref, *, h_real, wc_in):
    """Fallback for tiny H: full-extent blocks (always layout-legal), one store."""
    hp, wc_out = o_ref.shape
    val = x_ref[...]
    if hp > h_real:
        val = jnp.concatenate(
            [val, jnp.zeros((hp - h_real, wc_in), o_ref.dtype)], axis=0)
    if wc_out > wc_in:
        val = jnp.concatenate(
            [val, jnp.zeros((hp, wc_out - wc_in), o_ref.dtype)], axis=-1)
    o_ref[...] = val


# --------------------------------- wrapper -----------------------------------

def group_padder_forward(x, real_size, group_size, *, tile_h=None):
    """JAX/Pallas equivalent of GroupPadder.forward for channels-last NHWC input.

    x:          (B, H, W, C), channels last.
    real_size:  (real_H, real_W) actual (unpadded) content size.
    group_size: (gH, gW).
    Returns (x_padded, pd) with pd in torch F.pad format.
    """
    B, H, W, C = x.shape
    pd_pairs = get_real_missing_pad((H, W), real_size, group_size)
    pd = to_torch_pad(pd_pairs, emb_dim_last=True)

    pad_h = pd_pairs[0][1]
    pad_w = pd_pairs[1][1]
    Hp, Wp = H + pad_h, W + pad_w

    if pad_h == 0 and pad_w == 0:
        return x, pd

    wc_in, wc_out = W * C, Wp * C
    x2d = x.reshape(B, H, wc_in)  # lane-dense view; no data movement

    budget, vmem_limit, row_cap = _vmem_policy()
    gen = _tpu_generation()

    if tile_h is None:
        th = _pick_tile_h(H, wc_in, wc_out, x.dtype, budget, row_cap)
    else:
        th = _validate_tile_h(tile_h, H, x.dtype)

    # v7x has 2 TensorCores: with B == 1 make sure the parallel grid has >= 2 programs.
    if th > 0 and gen == "v7" and B == 1:
        g = _sublane_granule(x.dtype)
        while -(-Hp // th) < 2 and th > g:
            th = max(g, ((th // 2) // g) * g)

    if th >= 1 and H >= th:
        n_in_blocks = -(-H // th)    # input row blocks (clamp target for pad-only tiles)
        n_h_tiles = -(-Hp // th)     # output row tiles
        kernel = functools.partial(
            _tiled_pad_kernel, th=th, wc_in=wc_in, wc_out=wc_out, h_real=H)
        out2d = pl.pallas_call(
            kernel,
            out_shape=jax.ShapeDtypeStruct((B, Hp, wc_out), x.dtype),
            grid_spec=pltpu.PrefetchScalarGridSpec(
                num_scalar_prefetch=0,
                grid=(B, n_h_tiles),
                in_specs=[pl.BlockSpec(
                    (pl.Squeezed(), th, wc_in),
                    # clamp so pad-only tiles never index past the input extent
                    lambda b, h: (b, jnp.minimum(h, n_in_blocks - 1), 0))],
                out_specs=pl.BlockSpec(
                    (pl.Squeezed(), th, wc_out), lambda b, h: (b, h, 0)),
            ),
            compiler_params=pltpu.CompilerParams(
                dimension_semantics=("parallel", "parallel"),
                vmem_limit_bytes=vmem_limit),
        )(x2d)
    else:
        # Tiny-H corner case: full-extent blocks.
        kernel = functools.partial(_full_pad_kernel, h_real=H, wc_in=wc_in)
        out2d = pl.pallas_call(
            kernel,
            out_shape=jax.ShapeDtypeStruct((B, Hp, wc_out), x.dtype),
            grid_spec=pltpu.PrefetchScalarGridSpec(
                num_scalar_prefetch=0,
                grid=(B,),
                in_specs=[pl.BlockSpec((pl.Squeezed(), H, wc_in),
                                       lambda b: (b, 0, 0))],
                out_specs=pl.BlockSpec((pl.Squeezed(), Hp, wc_out),
                                       lambda b: (b, 0, 0)),
            ),
            compiler_params=pltpu.CompilerParams(
                dimension_semantics=("parallel",),
                vmem_limit_bytes=vmem_limit),
        )(x2d)

    return out2d.reshape(B, Hp, Wp, C), pd


# ----------------------------------- main ------------------------------------

if __name__ == "__main__":
    key = jax.random.PRNGKey(0)
    k1, k2, k3 = jax.random.split(key, 3)

    def ref_pad(x, pd):
        return jnp.pad(x, ((0, 0), (0, pd[-1]), (0, pd[-3]), (0, 0)))

    # Case 1: pad both H and W (auto row tile; interior + pad-only tiles).
    B, H, W, C = 2, 16, 16, 4
    x1 = jax.random.normal(k1, (B, H, W, C), dtype=jnp.float32)
    out1, pd1 = group_padder_forward(x1, real_size=(16, 16), group_size=(6, 6))
    out1 = jax.block_until_ready(out1)
    assert pd1 == (0, 0, 0, 2, 0, 2), pd1
    r1 = ref_pad(x1, pd1)
    assert out1.shape == r1.shape, (out1.shape, r1.shape)
    assert jnp.allclose(out1, r1), "case1 mismatch vs reference pad"

    # Case 1b: same input, explicit smaller row tile (multi-tile grid path).
    out1b, _ = group_padder_forward(x1, real_size=(16, 16), group_size=(6, 6),
                                    tile_h=8)
    out1b = jax.block_until_ready(out1b)
    assert jnp.allclose(out1b, r1), "case1b mismatch vs reference pad"

    # Case 2: H not a multiple of the row tile -> boundary tile (select + zero mix).
    x2 = jax.random.normal(k2, (1, 12, 16, 4), dtype=jnp.float32)
    out2, pd2 = group_padder_forward(x2, real_size=(12, 16), group_size=(8, 8))
    out2 = jax.block_until_ready(out2)
    assert pd2 == (0, 0, 0, 0, 0, 4), pd2
    r2 = ref_pad(x2, pd2)
    assert out2.shape == r2.shape, (out2.shape, r2.shape)
    assert jnp.allclose(out2, r2), "case2 mismatch vs reference pad"

    # Case 3: no padding needed -> early return, zero pd.
    out3, pd3 = group_padder_forward(x1, real_size=(16, 16), group_size=(8, 8))
    assert pd3 == (0, 0, 0, 0, 0, 0), pd3
    assert out3.shape == x1.shape and jnp.allclose(out3, x1)

    # Case 4: bf16 (sublane granule 16), W-only pad -> full-width composed stores.
    x4 = jax.random.normal(k3, (1, 32, 16, 4), dtype=jnp.bfloat16)
    out4, pd4 = group_padder_forward(x4, real_size=(32, 16), group_size=(8, 6))
    out4 = jax.block_until_ready(out4)
    assert pd4 == (0, 0, 0, 2, 0, 0), pd4
    r4 = ref_pad(x4, pd4)
    assert out4.shape == r4.shape, (out4.shape, r4.shape)
    assert jnp.array_equal(out4, r4), "case4 mismatch vs reference pad"

    print("KERNEL_OK")
</pallas_src>

<mosaic_0001>
module attributes {stable_mosaic.version = 11 : i64} {
  func.func @_tiled_pad_kernel(%arg0: i32, %arg1: i32, %arg2: memref<1x16x64xf32, #tpu.memory_space<vmem>>, %arg3: memref<1x16x72xf32, #tpu.memory_space<vmem>>) attributes {dimension_semantics = [#tpu.dimension_semantics<parallel>, #tpu.dimension_semantics<parallel>], iteration_bounds = array<i64: 2, 2>, scalar_prefetch = 0 : i64, scratch_operands = 0 : i64, tpu.core_type = #tpu.core_type<tc>, window_params = [{transform_indices = @transform_0, window_bounds = array<i64: 1, 16, 64>}, {transform_indices = @transform_1, window_bounds = array<i64: 1, 16, 72>}]} {
    %c16_i32 = arith.constant 16 : i32
    %0 = arith.muli %arg1, %c16_i32 : i32
    %c16_i32_0 = arith.constant 16 : i32
    %1 = arith.addi %0, %c16_i32_0 : i32
    %c16_i32_1 = arith.constant 16 : i32
    %2 = arith.cmpi sle, %1, %c16_i32_1 : i32
    %3 = arith.extui %2 : i1 to i32
    %c0_i32 = arith.constant 0 : i32
    %4 = arith.cmpi ne, %3, %c0_i32 : i32
    scf.if %4 {
      %c0 = arith.constant 0 : index
      %c0_8 = arith.constant 0 : index
      %c0_9 = arith.constant 0 : index
      %14 = vector.load %arg2[%c0, %c0_8, %c0_9] : memref<1x16x64xf32, #tpu.memory_space<vmem>>, vector<1x16x64xf32>
      %15 = vector.shape_cast %14 : vector<1x16x64xf32> to vector<16x64xf32>
      %cst = arith.constant 0.000000e+00 : f32
      %16 = vector.broadcast %cst : f32 to vector<16x8xf32>
      %17 = tpu.concatenate %15, %16 in 1 : vector<16x64xf32>, vector<16x8xf32> -> vector<16x72xf32>
      %c0_10 = arith.constant 0 : index
      %c0_11 = arith.constant 0 : index
      %c0_12 = arith.constant 0 : index
      %18 = vector.load %arg3[%c0_10, %c0_11, %c0_12] : memref<1x16x72xf32, #tpu.memory_space<vmem>>, vector<1x16x72xf32>
      %19 = vector.shape_cast %18 : vector<1x16x72xf32> to vector<16x72xf32>
      %20 = vector.shape_cast %17 : vector<16x72xf32> to vector<1x16x72xf32>
      tpu.vector_store %arg3[%c0_10, %c0_11, %c0_12], %20 {strides = array<i32>} : memref<1x16x72xf32, #tpu.memory_space<vmem>>, vector<1x16x72xf32>,
    } else {
    }
    %c16_i32_2 = arith.constant 16 : i32
    %5 = arith.cmpi sge, %0, %c16_i32_2 : i32
    %6 = arith.extui %5 : i1 to i32
    %c0_i32_3 = arith.constant 0 : i32
    %7 = arith.cmpi ne, %6, %c0_i32_3 : i32
    scf.if %7 {
      %cst = arith.constant 0.000000e+00 : f32
      %14 = vector.broadcast %cst : f32 to vector<16x72xf32>
      %c0 = arith.constant 0 : index
      %c0_8 = arith.constant 0 : index
      %c0_9 = arith.constant 0 : index
      %15 = vector.load %arg3[%c0, %c0_8, %c0_9] : memref<1x16x72xf32, #tpu.memory_space<vmem>>, vector<1x16x72xf32>
      %16 = vector.shape_cast %15 : vector<1x16x72xf32> to vector<16x72xf32>
      %17 = vector.shape_cast %14 : vector<16x72xf32> to vector<1x16x72xf32>
      tpu.vector_store %arg3[%c0, %c0_8, %c0_9], %17 {strides = array<i32>} : memref<1x16x72xf32, #tpu.memory_space<vmem>>, vector<1x16x72xf32>,
    } else {
    }
    %c16_i32_4 = arith.constant 16 : i32
    %8 = arith.cmpi slt, %0, %c16_i32_4 : i32
    %c16_i32_5 = arith.constant 16 : i32
    %9 = arith.addi %0, %c16_i32_5 : i32
    %c16_i32_6 = arith.constant 16 : i32
    %10 = arith.cmpi sgt, %9, %c16_i32_6 : i32
    %11 = arith.andi %8, %10 : i1
    %12 = arith.extui %11 : i1 to i32
    %c0_i32_7 = arith.constant 0 : i32
    %13 = arith.cmpi ne, %12, %c0_i32_7 : i32
    scf.if %13 {
      %14 = tpu.iota {dimensions = array<i32: 0>} : vector<16x1xi32>
      %15 = vector.broadcast %0 : i32 to vector<16x1xi32>
      %16 = arith.addi %14, %15 : vector<16x1xi32>
      %c16_i32_8 = arith.constant 16 : i32
      %17 = vector.broadcast %c16_i32_8 : i32 to vector<16x1xi32>
      %18 = arith.cmpi slt, %16, %17 : vector<16x1xi32>
      %c0 = arith.constant 0 : index
      %c0_9 = arith.constant 0 : index
      %c0_10 = arith.constant 0 : index
      %19 = vector.load %arg2[%c0, %c0_9, %c0_10] : memref<1x16x64xf32, #tpu.memory_space<vmem>>, vector<1x16x64xf32>
      %20 = vector.shape_cast %19 : vector<1x16x64xf32> to vector<16x64xf32>
      %cst = arith.constant 0.000000e+00 : f32
      %21 = vector.broadcast %cst : f32 to vector<16x64xf32>
      %22 = vector.shape_cast %18 : vector<16x1xi1> to vector<16x1xi1>
      %23 = vector.broadcast %22 : vector<16x1xi1> to vector<16x64xi1>
      %24 = arith.select %23, %20, %21 : vector<16x64xi1>, vector<16x64xf32>
      %cst_11 = arith.constant 0.000000e+00 : f32
      %25 = vector.broadcast %cst_11 : f32 to vector<16x8xf32>
      %26 = tpu.concatenate %24, %25 in 1 : vector<16x64xf32>, vector<16x8xf32> -> vector<16x72xf32>
      %c0_12 = arith.constant 0 : index
      %c0_13 = arith.constant 0 : index
      %c0_14 = arith.constant 0 : index
      %27 = vector.load %arg3[%c0_12, %c0_13, %c0_14] : memref<1x16x72xf32, #tpu.memory_space<vmem>>, vector<1x16x72xf32>
      %28 = vector.shape_cast %27 : vector<1x16x72xf32> to vector<16x72xf32>
      %29 = vector.shape_cast %26 : vector<16x72xf32> to vector<1x16x72xf32>
      tpu.vector_store %arg3[%c0_12, %c0_13, %c0_14], %29 {strides = array<i32>} : memref<1x16x72xf32, #tpu.memory_space<vmem>>, vector<1x16x72xf32>,
    } else {
    }
    return
  }
  func.func @transform_0(%arg0: i32, %arg1: i32) -> (i32, i32, i32) {
    %c0_i32 = arith.constant 0 : i32
    %0 = arith.minsi %arg1, %c0_i32 : i32
    %c0_i32_0 = arith.constant 0 : i32
    %c0_i32_1 = arith.constant 0 : i32
    return %arg0, %0, %c0_i32_0 : i32, i32, i32
  }
  func.func @transform_1(%arg0: i32, %arg1: i32) -> (i32, i32, i32) {
    %c0_i32 = arith.constant 0 : i32
    %c0_i32_0 = arith.constant 0 : i32
    return %arg0, %arg1, %c0_i32 : i32, i32, i32
  }
}

</mosaic_0001>

<llo_original>
// kernel: tpu_custom_call.1
$region0: #{tpu_custom_call.1}
  #allocation0 [shape = 'u32[]', space=smem, size = 0x4, offset = 0x4, fixed_abs, tag = 'smem constant byte address 0x4 - core index']
  #allocation1 [shape = 'u32[72,128]{1,0:T(1,128)}', space=vmem, size = 0x9000, scoped, tag = 'internal scratch']
  %s0 = inlined_call_operand.hbm [shape: f32[2,16,64], index: 0, kind: input, shape index: {}]
  %s1 = inlined_call_operand.vmem [shape: f32[2,18,72], index: 1, kind: output, shape index: {}]
  %s2 = sld [smem:[#allocation0]]
  $region101: #{tpu_custom_call.1} parent=0
    _
  %s4 = ssub.s32 1, %s2
  %s5 = scalar_select 0, %s4, %s2
  $region1: #{tpu_custom_call.1} parent=0
    #allocation2 [shape = 'u8[16384]{0}', space=vmem, size = 0x4000, scoped, tag = 'input window, operand 0']
    #allocation3 [shape = 's32[2]{0}', space=sflag, size = 0x8, scoped, tag = 'scoped memory for tpu_custom_call.1']
    #allocation4 [shape = 'u8[16384]{0}', space=vmem, size = 0x4000, scoped, tag = 'output window, operand 0']
    %6 = vsyncpa [#allocation3], 0
    %s7 = scalar_lea.sflag [#allocation3], 1
    %8 = vsyncpa %s7, 0
    loop: start=0, step=1, limit=6
    $region2: #{tpu_custom_call.1} parent=1 // loop_pre_header
      _
    $region3: #{tpu_custom_call.1} parent=1 // loop_header
      %s10 = sphi 0, %s14
      %p11 = scmp.ge.s32.totalorder %s10, 6
      %s17 = sphi 0, %s29
      %s18 = sphi 0, %s25
      %s19 = sphi 0, %s17
      %s20 = sphi 0, %s18
      %s21 = sphi 0, %s19
      %s22 = sphi 0, %s20
      %s38 = sphi 0, %s40
      %s41 = sphi 0, %s38
      %s42 = sphi 0, %s41
      %s58 = sphi 0, %s42
      %s66 = sphi 0, %s68
      %s69 = sphi 0, %s66
      %s70 = sphi 0, %s69
      %s86 = sphi 0, %s70
    $region4: #{tpu_custom_call.1} parent=1 // loop_header_branch
      %13 = sbr.rel (%p11) target = $region8
    $region5: #{tpu_custom_call.1} parent=1 // loop_body
      %s15 = ssub.s32 %s10, 1
      %s16 = ssub.s32 %s10, 2
      %s23 = sadd.s32 1, %s18
      %p24 = scmp.ge.s32.totalorder %s23, 2
      %s25 = scalar_select %p24, 0, %s23
      %s26 = sadd.s32 1, %s17
      %s27 = scalar_select %p24, %s26, %s17
      %p28 = scmp.ge.s32.totalorder %s27, 2
      %s29 = scalar_select %p28, 0, %s27
      %p30 = scmp.lt.s32.totalorder %s18, 0
      %s31 = scalar_select %p30, %s18, 0
      %p32 = scmp.lt.s32.totalorder %s25, 0
      %s33 = scalar_select %p32, %s25, 0
      %s34 = ssub.s32 %s17, %s29
      %s35 = ssub.s32 %s31, %s33
      %s36 = sor.u32 %s34, %s35
      %p37 = scmp.eq.s32.totalorder %s36, 0
      %s39 = sadd.s32 %s38, 1
      %s40 = scalar_select %p37, %s38, %s39
      %p43 = pneg %p37
      %p44 = scmp.eq.s32.totalorder %s10, 3
      %p45 = por %p43, %p44
      %p46 = scmp.ne.s32.totalorder %s38, %s41
      %p47 = scmp.eq.s32.totalorder %s10, 0
      %p48 = por %p46, %p47
      %p49 = scmp.ne.s32.totalorder %s38, %s41
      %p50 = scmp.eq.s32.totalorder %s15, 3
      %p51 = por %p49, %p50
      %p52 = scmp.ne.s32.totalorder %s41, %s42
      %p53 = scmp.eq.s32.totalorder %s15, 0
      %p54 = por %p52, %p53
      %p55 = scmp.ne.s32.totalorder %s41, %s42
      %p56 = scmp.eq.s32.totalorder %s16, 3
      %p57 = por %p55, %p56
      %p59 = scmp.ne.s32.totalorder %s42, %s58
      %p60 = scmp.eq.s32.totalorder %s16, 0
      %p61 = por %p59, %p60
      %s62 = ssub.s32 %s17, %s29
      %s63 = ssub.s32 %s18, %s25
      %s64 = sor.u32 %s62, %s63
      %p65 = scmp.eq.s32.totalorder %s64, 0
      %s67 = sadd.s32 %s66, 1
      %s68 = scalar_select %p65, %s66, %s67
      %p71 = pneg %p65
      %p72 = scmp.eq.s32.totalorder %s10, 3
      %p73 = por %p71, %p72
      %p74 = scmp.ne.s32.totalorder %s66, %s69
      %p75 = scmp.eq.s32.totalorder %s10, 0
      %p76 = por %p74, %p75
      %p77 = scmp.ne.s32.totalorder %s66, %s69
      %p78 = scmp.eq.s32.totalorder %s15, 3
      %p79 = por %p77, %p78
      %p80 = scmp.ne.s32.totalorder %s69, %s70
      %p81 = scmp.eq.s32.totalorder %s15, 0
      %p82 = por %p80, %p81
      %p83 = scmp.ne.s32.totalorder %s69, %s70
      %p84 = scmp.eq.s32.totalorder %s16, 3
      %p85 = por %p83, %p84
      %p87 = scmp.ne.s32.totalorder %s70, %s86
      %p88 = scmp.eq.s32.totalorder %s16, 0
      %p89 = por %p87, %p88
      %p90 = scmp.le.s32.totalorder 1, %s10
      %p91 = scmp.lt.s32.totalorder %s10, 5
      %p92 = pnand %p90, %p91
      %p93 = pneg %p92
      // Predicated region
      $region9: #{tpu_custom_call.1} parent=5 // pred_check
        _
      $region10: #{tpu_custom_call.1} parent=5 // pred_check_branch
        %95 = sbr.rel (%p92) target = $region12
      $region11: #{tpu_custom_call.1} parent=5 // pred_region
        %s96 = ssub.s32 %s10, 1
      $region12: #{tpu_custom_call.1} parent=5 // pred_fallthru
        _
      %p97 = scmp.lt.s32.totalorder %s10, 4
      // Predicated region
      $region13: #{tpu_custom_call.1} parent=5 // pred_check
        %p98 = pneg %p97
      $region14: #{tpu_custom_call.1} parent=5 // pred_check_branch
        %100 = sbr.rel (%p98) target = $region16
      $region15: #{tpu_custom_call.1} parent=5 // pred_region
        // Predicated region
        $region17: #{tpu_custom_call.1} parent=15 // pred_check
          %p101 = pneg %p48
        $region18: #{tpu_custom_call.1} parent=15 // pred_check_branch
          %103 = sbr.rel (%p101) target = $region20
        $region19: #{tpu_custom_call.1} parent=15 // pred_region
          %s104 = sand.u32 %s38, 1
          %s105 = scalar_lea.sflag [#allocation3], %s104
          %s106 = sand.u32 %s38, 1
          %s107 = smul.addr %s106, 16
          %s108 = scalar_lea.vmem [#allocation2], %s107
          %p109 = scmp.lt.s32.totalorder %s18, 0
          %s110 = scalar_select %p109, %s18, 0
          %s111 = smul.u32 2, %s110
          %113 = vsyncadd %s105, 0
          %s114 = smul.addr %s17, 2
          %s115 = sadd.s32 %s111, %s114
          %s116 = smul.addr %s115, 8
          %s117 = scalar_lea.hbm %s0, %s116
          %s118 = sshll.u32 %s117, 4
          %s119 = int_to_ptr.hbm [resolvable:$true] %s118
          %s120 = sshll.u32 %s108, 4
          %s121 = int_to_ptr.vmem [resolvable:$true] %s120
          %126 = dma.hbm_to_vmem [thread:$0]  %s119, 256, %s121, %s105, 128, 128, 8
        $region20: #{tpu_custom_call.1} parent=15 // pred_fallthru
          _
      $region16: #{tpu_custom_call.1} parent=5 // pred_fallthru
        _
      %p127 = scmp.le.s32.totalorder 1, %s10
      %p128 = scmp.lt.s32.totalorder %s10, 5
      %p129 = pnand %p127, %p128
      %p130 = pneg %p129
      // Predicated region
      $region21: #{tpu_custom_call.1} parent=5 // pred_check
        _
      $region22: #{tpu_custom_call.1} parent=5 // pred_check_branch
        %132 = sbr.rel (%p129) target = $region24
      $region23: #{tpu_custom_call.1} parent=5 // pred_region
        %s133 = ssub.s32 %s10, 1
        %s134 = sand.u32 %s41, 1
        %s135 = scalar_lea.sflag [#allocation3], %s134
        %s136 = sand.u32 %s41, 1
        %s137 = smul.addr %s136, 16
        %s138 = scalar_lea.vmem [#allocation2], %s137
        // Predicated region
        $region25: #{tpu_custom_call.1} parent=23 // pred_check
          %p139 = pneg %p54
        $region26: #{tpu_custom_call.1} parent=23 // pred_check_branch
          %141 = sbr.rel (%p139) target = $region28
        $region27: #{tpu_custom_call.1} parent=23 // pred_region
          %143 = dma.done %s135, 256
        $region28: #{tpu_custom_call.1} parent=23 // pred_fallthru
          _
        %s144 = sand.u32 %s41, 1
        %s145 = scalar_lea.sflag [#allocation3], %s144
        %s146 = sand.u32 %s41, 1
        %s147 = smul.addr %s146, 16
        %s148 = scalar_lea.vmem [#allocation2], %s147
        %p149 = pneg %p54
        %p150 = pneg %p51
        %p151 = pneg %p82
        %p152 = pneg %p79
        %s153 = sand.u32 %s69, 1
        %s154 = sand.u32 %s69, 1
        %s155 = smul.addr %s154, 16
        %s156 = scalar_lea.vmem [#allocation4], %s155
        %p157 = scmp.lt.s32.totalorder %s20, 0
        %s158 = scalar_select %p157, %s20, 0
        %s159 = smul.u32 2, %s158
        %s160 = smul.u32 2, %s20
        %s161 = ssub.s32 3, %s160
        %p162 = scmp.lt.s32.totalorder %s161, 2
        %s163 = scalar_select %p162, %s161, 2
        %s164 = smul.u32 8, %s163
        %s165 = smul.u32 %s20, 16
        %s166 = sadd.s32 %s165, 16
        %p167 = scmp.le.s32.totalorder %s166, 16
        // Predicated region
        $region29: #{tpu_custom_call.1} parent=23 // pred_check
          %p168 = pneg %p167
        $region30: #{tpu_custom_call.1} parent=23 // pred_check_branch
          %170 = sbr.rel (%p168) target = $region32
        $region31: #{tpu_custom_call.1} parent=23 // pred_region
          %v171 = vld [vmem:[%s138] sm:$0xff]
          %v172 = vld [vmem:[%s138 + $0x8] sm:$0xff]
          %vm173 = vcmask 523264
          %v174 = vsel %vm173, %v171, 0.0
          %v175 = vsel %vm173, %v172, 0.0
          %vm176 = vcmask 588800
          %177 = vst.msk [vmem:[%s156] sm:$0xff] %vm176, %v174
          %178 = vst.msk [vmem:[%s156 + $0x8] sm:$0xff] %vm176, %v175
        $region32: #{tpu_custom_call.1} parent=23 // pred_fallthru
          _
        %p179 = scmp.ge.s32.totalorder %s165, 16
        // Predicated region
        $region33: #{tpu_custom_call.1} parent=23 // pred_check
          %p180 = pneg %p179
        $region34: #{tpu_custom_call.1} parent=23 // pred_check_branch
          %182 = sbr.rel (%p180) target = $region36
        $region35: #{tpu_custom_call.1} parent=23 // pred_region
          %vm183 = vcmask 588800
          %184 = vst.msk [vmem:[%s156] sm:$0xff] %vm183, 0.0
          %185 = vst.msk [vmem:[%s156 + $0x8] sm:$0xff] %vm183, 0.0
        $region36: #{tpu_custom_call.1} parent=23 // pred_fallthru
          _
        %p186 = scmp.lt.s32.totalorder %s165, 16
        %p187 = scmp.gt.s32.totalorder %s166, 16
        %p188 = pnand %p186, %p187
        %p189 = pneg %p188
        // Predicated region
        $region37: #{tpu_custom_call.1} parent=23 // pred_check
          _
        $region38: #{tpu_custom_call.1} parent=23 // pred_check_branch
          %191 = sbr.rel (%p188) target = $region40
        $region39: #{tpu_custom_call.1} parent=23 // pred_region
          %v192 = vlaneseq
          %v193 = vshrl.u32 %v192, 7
          %v194 = vadd.s32 %v193, 8
          %v195 = vstv %s165
          %v196 = vadd.s32 %v193, %v195
          %v197 = vadd.s32 %v194, %v195
          %vm198 = vcmp.lt.s32.totalorder %v196, 16
          %vm199 = vcmp.lt.s32.totalorder %v197, 16
          %v200 = vld [vmem:[%s138] sm:$0xff]
          %v201 = vld [vmem:[%s138 + $0x8] sm:$0xff]
          %v202 = vsel %vm198, 1, 0
          %v203 = vsel %vm199, 1, 0
          %vm204 = vcmp.eq.s32.totalorder %v202, 1
          %vm205 = vcmp.eq.s32.totalorder %v203, 1
          %v206 = vsel %vm204, %v200, 0.0
          %v207 = vsel %vm205, %v201, 0.0
          %vm208 = vcmask 523264
          %v209 = vsel %vm208, %v206, 0.0
          %v210 = vsel %vm208, %v207, 0.0
          %vm211 = vcmask 588800
          %212 = vst.msk [vmem:[%s156] sm:$0xff] %vm211, %v209
          %213 = vst.msk [vmem:[%s156 + $0x8] sm:$0xff] %vm211, %v210
        $region40: #{tpu_custom_call.1} parent=23 // pred_fallthru
          _
        %s214 = sand.u32 %s69, 1
        %s215 = sand.u32 %s69, 1
        %s216 = smul.addr %s215, 16
        %s217 = scalar_lea.vmem [#allocation4], %s216
        // Predicated region
        $region41: #{tpu_custom_call.1} parent=23 // pred_check
          %p218 = pneg %p79
        $region42: #{tpu_custom_call.1} parent=23 // pred_check_branch
          %220 = sbr.rel (%p218) target = $region44
        $region43: #{tpu_custom_call.1} parent=23 // pred_region
          %s221 = smul.u32 2, %s20
          %s222 = ssub.s32 3, %s221
          %p223 = scmp.lt.s32.totalorder %s222, 2
          %s224 = scalar_select %p223, %s222, 2
          %s225 = smul.u32 8, %s224
          %p226 = scmp.ne.s32.totalorder 0, %s225
          %s227 = smul.addr %s19, 3
          %s228 = sadd.s32 %s221, %s227
          %s229 = smul.addr %s228, 8
          %s230 = scalar_lea.vmem %s1, %s229
          // Predicated region
          $region45: #{tpu_custom_call.1} parent=43 // pred_check
            %p231 = pneg %p226
          $region46: #{tpu_custom_call.1} parent=43 // pred_check_branch
            %233 = sbr.rel (%p231) target = $region48
          $region47: #{tpu_custom_call.1} parent=43 // pred_region
            // Predicated region
            $region49: #{tpu_custom_call.1} parent=47 // pred_check
              _
            $region50: #{tpu_custom_call.1} parent=47 // pred_check_branch
              %235 = sbr.rel (0) target = $region52
            $region51: #{tpu_custom_call.1} parent=47 // pred_region
              // Predicated region
              $region71: #{tpu_custom_call.1} parent=51 // pred_check
                _
              $region72: #{tpu_custom_call.1} parent=51 // pred_check_branch
                %287 = sbr.rel (0) target = $region74
              $region73: #{tpu_custom_call.1} parent=51 // pred_region
                %s288 = sshrl.u32 %s224, 1
                // While loop
                $region75: #{tpu_custom_call.1} parent=73 // loop_pre_header
                  _
                $region76: #{tpu_custom_call.1} parent=73 // loop_header
                  %s290 = sphi 0, %s292
                  %p291 = scmp.ge.s32.totalorder %s290, %s288
                  %s295 = sphi 0, %s304
                  %s296 = sphi %s217, %s307
                  %s297 = sphi %s230, %s308
                $region77: #{tpu_custom_call.1} parent=73 // loop_header_branch
                  %294 = sbr.rel (%p291) target = $region81
                $region78: #{tpu_custom_call.1} parent=73 // loop_body
                  %v298 = vld [vmem:[%s296] sm:$0xff]
                  %299 = vst [vmem:[%s297] sm:$0xff] %v298
                  %v300 = vld [vmem:[%s296 + $0x8] sm:$0xff]
                  %301 = vst [vmem:[%s297 + $0x8] sm:$0xff] %v300
                  %s302 = sadd.s32 1, %s295
                  %p303 = scmp.ge.s32.totalorder %s302, %s288
                  %s304 = scalar_select %p303, 0, %s302
                  %s305 = smul.u32 %s304, 16
                  %s306 = smul.u32 %s304, 16
                  %s307 = scalar_lea.vmem %s217, %s305 [#allocation4]
                  %s308 = scalar_lea.vmem %s230, %s306
                $region79: #{tpu_custom_call.1} parent=73 // loop_footer
                  %s292 = sadd.s32 %s290, 1
                $region80: #{tpu_custom_call.1} parent=73 // loop_footer_branch
                  %289 = sbr.rel target = $region76
                $region81: #{tpu_custom_call.1} parent=73 // loop_exit
                  _
                %s309 = sshrl.u32 %s224, 1
                %s310 = sand.u32 %s224, 1
                %s311 = smul.u32 %s309, 2
                %s312 = smul.u32 8, %s311
                %s313 = scalar_lea.vmem %s217, %s312 [#allocation4]
                %s314 = smul.u32 8, %s311
                %s315 = scalar_lea.vmem %s230, %s314
                // While loop
                $region82: #{tpu_custom_call.1} parent=73 // loop_pre_header
                  _
                $region83: #{tpu_custom_call.1} parent=73 // loop_header
                  %s317 = sphi 0, %s319
                  %p318 = scmp.ge.s32.totalorder %s317, %s310
                  %s322 = sphi 0, %s329
                  %s323 = sphi %s313, %s332
                  %s324 = sphi %s315, %s333
                $region84: #{tpu_custom_call.1} parent=73 // loop_header_branch
                  %321 = sbr.rel (%p318) target = $region88
                $region85: #{tpu_custom_call.1} parent=73 // loop_body
                  %v325 = vld [vmem:[%s323] sm:$0xff]
                  %326 = vst [vmem:[%s324] sm:$0xff] %v325
                  %s327 = sadd.s32 1, %s322
                  %p328 = scmp.ge.s32.totalorder %s327, %s310
                  %s329 = scalar_select %p328, 0, %s327
                  %s330 = smul.u32 %s329, 8
                  %s331 = smul.u32 %s329, 8
                  %s332 = scalar_lea.vmem %s313, %s330 [#allocation4]
                  %s333 = scalar_lea.vmem %s315, %s331
                $region86: #{tpu_custom_call.1} parent=73 // loop_footer
                  %s319 = sadd.s32 %s317, 1
                $region87: #{tpu_custom_call.1} parent=73 // loop_footer_branch
                  %316 = sbr.rel target = $region83
                $region88: #{tpu_custom_call.1} parent=73 // loop_exit
                  _
              $region74: #{tpu_custom_call.1} parent=51 // pred_fallthru
                _
              // Predicated region
              $region89: #{tpu_custom_call.1} parent=51 // pred_check
                _
              $region90: #{tpu_custom_call.1} parent=51 // pred_check_branch
                %335 = sbr.rel target = $region92
              $region91: #{tpu_custom_call.1} parent=51 // pred_region
                _
              $region92: #{tpu_custom_call.1} parent=51 // pred_fallthru
                _
            $region52: #{tpu_custom_call.1} parent=47 // pred_fallthru
              _
            // Predicated region
            $region53: #{tpu_custom_call.1} parent=47 // pred_check
              _
            $region54: #{tpu_custom_call.1} parent=47 // pred_check_branch
              %237 = sbr.rel target = $region56
            $region55: #{tpu_custom_call.1} parent=47 // pred_region
              %s239 = ssub.s32 256, 1
              %s240 = sshrl.u32 %s224, 1
              // While loop
              $region57: #{tpu_custom_call.1} parent=55 // loop_pre_header
                _
              $region58: #{tpu_custom_call.1} parent=55 // loop_header
                %s242 = sphi 0, %s244
                %p243 = scmp.ge.s32.totalorder %s242, %s240
                %s247 = sphi 0, %s256
                %s248 = sphi %s217, %s259
                %s249 = sphi %s230, %s260
              $region59: #{tpu_custom_call.1} parent=55 // loop_header_branch
                %246 = sbr.rel (%p243) target = $region63
              $region60: #{tpu_custom_call.1} parent=55 // loop_body
                %v250 = vld [vmem:[%s248] sm:%s239]
                %251 = vst [vmem:[%s249] sm:%s239] %v250
                %v252 = vld [vmem:[%s248 + $0x8] sm:%s239]
                %253 = vst [vmem:[%s249 + $0x8] sm:%s239] %v252
                %s254 = sadd.s32 1, %s247
                %p255 = scmp.ge.s32.totalorder %s254, %s240
                %s256 = scalar_select %p255, 0, %s254
                %s257 = smul.u32 %s256, 16
                %s258 = smul.u32 %s256, 16
                %s259 = scalar_lea.vmem %s217, %s257 [#allocation4]
                %s260 = scalar_lea.vmem %s230, %s258
              $region61: #{tpu_custom_call.1} parent=55 // loop_footer
                %s244 = sadd.s32 %s242, 1
              $region62: #{tpu_custom_call.1} parent=55 // loop_footer_branch
                %241 = sbr.rel target = $region58
              $region63: #{tpu_custom_call.1} parent=55 // loop_exit
                _
              %s261 = sshrl.u32 %s224, 1
              %s262 = sand.u32 %s224, 1
              %s263 = smul.u32 %s261, 2
              %s264 = smul.u32 8, %s263
              %s265 = scalar_lea.vmem %s217, %s264 [#allocation4]
              %s266 = smul.u32 8, %s263
              %s267 = scalar_lea.vmem %s230, %s266
              // While loop
              $region64: #{tpu_custom_call.1} parent=55 // loop_pre_header
                _
              $region65: #{tpu_custom_call.1} parent=55 // loop_header
                %s269 = sphi 0, %s271
                %p270 = scmp.ge.s32.totalorder %s269, %s262
                %s274 = sphi 0, %s281
                %s275 = sphi %s265, %s284
                %s276 = sphi %s267, %s285
              $region66: #{tpu_custom_call.1} parent=55 // loop_header_branch
                %273 = sbr.rel (%p270) target = $region70
              $region67: #{tpu_custom_call.1} parent=55 // loop_body
                %v277 = vld [vmem:[%s275] sm:%s239]
                %278 = vst [vmem:[%s276] sm:%s239] %v277
                %s279 = sadd.s32 1, %s274
                %p280 = scmp.ge.s32.totalorder %s279, %s262
                %s281 = scalar_select %p280, 0, %s279
                %s282 = smul.u32 %s281, 8
                %s283 = smul.u32 %s281, 8
                %s284 = scalar_lea.vmem %s265, %s282 [#allocation4]
                %s285 = scalar_lea.vmem %s267, %s283
              $region68: #{tpu_custom_call.1} parent=55 // loop_footer
                %s271 = sadd.s32 %s269, 1
              $region69: #{tpu_custom_call.1} parent=55 // loop_footer_branch
                %268 = sbr.rel target = $region65
              $region70: #{tpu_custom_call.1} parent=55 // loop_exit
                _
            $region56: #{tpu_custom_call.1} parent=47 // pred_fallthru
              _
          $region48: #{tpu_custom_call.1} parent=43 // pred_fallthru
            _
          %336 = vnop
        $region44: #{tpu_custom_call.1} parent=23 // pred_fallthru
          _
      $region24: #{tpu_custom_call.1} parent=5 // pred_fallthru
        _
      %p337 = scmp.le.s32.totalorder 2, %s10
      // Predicated region
      $region93: #{tpu_custom_call.1} parent=5 // pred_check
        %p338 = pneg %p337
      $region94: #{tpu_custom_call.1} parent=5 // pred_check_branch
        %340 = sbr.rel (%p338) target = $region96
      $region95: #{tpu_custom_call.1} parent=5 // pred_region
        %s341 = ssub.s32 %s10, 2
        // Predicated region
        $region97: #{tpu_custom_call.1} parent=95 // pred_check
          %p342 = pneg %p85
        $region98: #{tpu_custom_call.1} parent=95 // pred_check_branch
          %344 = sbr.rel (%p342) target = $region100
        $region99: #{tpu_custom_call.1} parent=95 // pred_region
          %s345 = sand.u32 %s70, 1
          %s346 = sand.u32 %s70, 1
          %s347 = smul.addr %s346, 16
          %s348 = scalar_lea.vmem [#allocation4], %s347
        $region100: #{tpu_custom_call.1} parent=95 // pred_fallthru
          _
      $region96: #{tpu_custom_call.1} parent=5 // pred_fallthru
        _
    $region6: #{tpu_custom_call.1} parent=1 // loop_footer
      %s14 = sadd.s32 1, %s10
    $region7: #{tpu_custom_call.1} parent=1 // loop_footer_branch
      %9 = sbr.rel target = $region3
    $region8: #{tpu_custom_call.1} parent=1 // loop_exit
      _
    %349 = vsyncpa [#allocation3], 1
    %s350 = scalar_lea.sflag [#allocation3], 1
    %351 = vsyncpa %s350, 1

</llo_original>
